<compile_context>
chip_gen: v6e
topology: v6e:2x2x1
jax: 0.10.0
libtpu: 0.0.40
codegen_flags: <defaults>
</compile_context>

<pallas_src>
import jax
import jax.numpy as jnp
from jax.experimental import pallas as pl
from jax.experimental.pallas import tpu as pltpu


def sae_kernel(x_ref, w1_ref, b1_ref, w2_ref, b2_ref, wc_ref, bc_ref,
               c_ref, h1_ref, xrec_ref):
    # Encoder: h1 = relu(x @ W1 + b1)    (bf16 MXU operands, f32 accumulation)
    x = x_ref[...]
    h1 = jnp.dot(x, w1_ref[...], preferred_element_type=jnp.float32) + b1_ref[...]
    h1 = jnp.maximum(h1, 0.0)
    h1_ref[...] = h1                       # f32 output

    # h1 reused (VMEM-resident) for both downstream matmuls; narrow only the
    # MXU operand, keep bias add / ReLU / stores in f32.
    h1_mx = h1.astype(w2_ref.dtype)

    # Decoder: x_reconstruct = relu(h1 @ W2 + b2)
    xr = jnp.dot(h1_mx, w2_ref[...], preferred_element_type=jnp.float32) + b2_ref[...]
    xrec_ref[...] = jnp.maximum(xr, 0.0)

    # Classifier head (lane-padded to 128 columns): c = h1 @ Wc + bc
    c_ref[...] = (
        jnp.dot(h1_mx, wc_ref[...], preferred_element_type=jnp.float32) + bc_ref[...]
    )


def sparse_autoencoder_forward(x, w1_t, b1, w2_t, b2, wc_t, bc,
                               *, tm=256, mxu_dtype=jnp.bfloat16):
    """x: (B, X_dim) f32; w*_t are (in, out) transposed Linear weights; b* are (1, out)."""
    B, X = x.shape
    H = w1_t.shape[1]
    C = wc_t.shape[1]

    # --- pad classifier head to a lane-dense (multiple of 128) output width ---
    C_pad = max(128, ((C + 127) // 128) * 128)
    wc_p = jnp.zeros((H, C_pad), wc_t.dtype).at[:, :C].set(wc_t)
    bc_p = jnp.zeros((1, C_pad), bc.dtype).at[:, :C].set(bc)

    # --- pad batch to a multiple of the batch tile TM ---
    B_pad = ((B + tm - 1) // tm) * tm
    if B_pad != B:
        x = jnp.pad(x, ((0, B_pad - B), (0, 0)))

    # --- narrow MXU operands to bf16; biases / accumulation / outputs stay f32 ---
    x_mx = x.astype(mxu_dtype)
    w1_mx = w1_t.astype(mxu_dtype)
    w2_mx = w2_t.astype(mxu_dtype)
    wc_mx = wc_p.astype(mxu_dtype)
    b1_f = b1.astype(jnp.float32)
    b2_f = b2.astype(jnp.float32)
    bc_f = bc_p.astype(jnp.float32)

    grid = (B_pad // tm,)
    const = lambda i: (0, 0)          # weights/biases: resident, DMA'd once
    rowtile = lambda i: (i, 0)        # batch-tiled arrays

    itemsize = jnp.dtype(mxu_dtype).itemsize
    flops = 2 * B_pad * (X * H + H * X + H * C_pad)
    bytes_accessed = (
        B_pad * X * itemsize                                   # x
        + (X * H + H * X + H * C_pad) * itemsize               # weights
        + (H + X + C_pad) * 4                                  # biases
        + B_pad * (C_pad + H + X) * 4                          # outputs (f32)
    )

    c_full, h1_full, xrec_full = pl.pallas_call(
        sae_kernel,
        out_shape=(
            jax.ShapeDtypeStruct((B_pad, C_pad), jnp.float32),  # c (lane-padded)
            jax.ShapeDtypeStruct((B_pad, H), jnp.float32),      # h1
            jax.ShapeDtypeStruct((B_pad, X), jnp.float32),      # x_reconstruct
        ),
        grid_spec=pltpu.PrefetchScalarGridSpec(
            num_scalar_prefetch=0,
            grid=grid,
            in_specs=[
                pl.BlockSpec((tm, X), rowtile),       # x tile
                pl.BlockSpec((X, H), const),          # W1
                pl.BlockSpec((1, H), const),          # b1
                pl.BlockSpec((H, X), const),          # W2
                pl.BlockSpec((1, X), const),          # b2
                pl.BlockSpec((H, C_pad), const),      # Wc (padded)
                pl.BlockSpec((1, C_pad), const),      # bc (padded)
            ],
            out_specs=[
                pl.BlockSpec((tm, C_pad), rowtile),
                pl.BlockSpec((tm, H), rowtile),
                pl.BlockSpec((tm, X), rowtile),
            ],
        ),
        compiler_params=pltpu.CompilerParams(
            dimension_semantics=("parallel",),        # shard batch tiles across TCs (v7x)
            vmem_limit_bytes=32 * 1024 * 1024,        # explicit; fits v5e/v6e/v7x scoped VMEM
        ),
        cost_estimate=pl.CostEstimate(
            flops=flops, transcendentals=0, bytes_accessed=bytes_accessed),
    )(x_mx, w1_mx, b1_f, w2_mx, b2_f, wc_mx, bc_f)

    # strip batch padding and classifier lane padding
    return c_full[:B, :C], h1_full[:B], xrec_full[:B]


def kaiming_normal(key, out_features, in_features):
    # torch.nn.init.kaiming_normal_ default: fan_in mode, leaky_relu(a=0) -> gain=sqrt(2)
    std = (2.0 / in_features) ** 0.5
    return std * jax.random.normal(key, (out_features, in_features), jnp.float32)


def linear_bias(key, out_features, in_features):
    # PyTorch Linear default bias init: U(-1/sqrt(fan_in), 1/sqrt(fan_in))
    bound = 1.0 / (in_features ** 0.5)
    return jax.random.uniform(
        key, (1, out_features), jnp.float32, minval=-bound, maxval=bound
    )


def reference_forward(x, w1_t, b1, w2_t, b2, wc_t, bc, mxu_dtype=jnp.bfloat16):
    # Plain-JAX reference using the SAME bf16-at-matmul / f32-accumulate recipe
    # as the kernel (so the comparison isolates kernel correctness, not bf16 error).
    x_mx = x.astype(mxu_dtype)
    h1 = jnp.maximum(
        jnp.dot(x_mx, w1_t.astype(mxu_dtype), preferred_element_type=jnp.float32) + b1, 0.0)
    h1_mx = h1.astype(mxu_dtype)
    xr = jnp.maximum(
        jnp.dot(h1_mx, w2_t.astype(mxu_dtype), preferred_element_type=jnp.float32) + b2, 0.0)
    c = jnp.dot(h1_mx, wc_t.astype(mxu_dtype), preferred_element_type=jnp.float32) + bc
    return c, h1, xr


if __name__ == "__main__":
    # Small shapes consistent with the module: X_dim visible, hidden = X_dim // 2.
    B = 8          # batch
    X_dim = 256    # visible size (feature dim of the data loader rows)
    hidden = X_dim // 2
    c_dim = 8      # number of classes

    key = jax.random.PRNGKey(0)
    kx, k1, k1b, k2, k2b, kc, kcb = jax.random.split(key, 7)

    x = jax.random.normal(kx, (B, X_dim), jnp.float32)

    # PyTorch Linear stores weight as (out, in); pre-transpose to (in, out).
    W1 = kaiming_normal(k1, hidden, X_dim)
    b1 = linear_bias(k1b, hidden, X_dim)
    W2 = kaiming_normal(k2, X_dim, hidden)
    b2 = linear_bias(k2b, X_dim, hidden)
    Wc = kaiming_normal(kc, c_dim, hidden)
    bc = linear_bias(kcb, c_dim, hidden)

    w1_t, w2_t, wc_t = W1.T, W2.T, Wc.T

    c, h1, x_rec = sparse_autoencoder_forward(x, w1_t, b1, w2_t, b2, wc_t, bc)
    jax.block_until_ready((c, h1, x_rec))

    # Cross-check against plain-JAX reference (same bf16 matmul operands).
    c_ref, h1_ref, xr_ref = reference_forward(x, w1_t, b1, w2_t, b2, wc_t, bc)
    assert c.shape == (B, c_dim) and h1.shape == (B, hidden) and x_rec.shape == (B, X_dim)
    assert jnp.allclose(c, c_ref, atol=2e-3, rtol=2e-3)
    assert jnp.allclose(h1, h1_ref, atol=2e-3, rtol=2e-3)
    assert jnp.allclose(x_rec, xr_ref, atol=2e-3, rtol=2e-3)

    print("KERNEL_OK")
</pallas_src>

<mosaic_0001>
module attributes {stable_mosaic.version = 11 : i64} {
  func.func @sae_kernel(%arg0: i32, %arg1: memref<256x256xbf16, #tpu.memory_space<vmem>>, %arg2: memref<256x128xbf16, #tpu.memory_space<vmem>>, %arg3: memref<1x128xf32, #tpu.memory_space<vmem>>, %arg4: memref<128x256xbf16, #tpu.memory_space<vmem>>, %arg5: memref<1x256xf32, #tpu.memory_space<vmem>>, %arg6: memref<128x128xbf16, #tpu.memory_space<vmem>>, %arg7: memref<1x128xf32, #tpu.memory_space<vmem>>, %arg8: memref<256x128xf32, #tpu.memory_space<vmem>>, %arg9: memref<256x128xf32, #tpu.memory_space<vmem>>, %arg10: memref<256x256xf32, #tpu.memory_space<vmem>>) attributes {dimension_semantics = [#tpu.dimension_semantics<parallel>], iteration_bounds = array<i64: 1>, scalar_prefetch = 0 : i64, scratch_operands = 0 : i64, tpu.core_type = #tpu.core_type<tc>, window_params = [{transform_indices = @transform_0, window_bounds = array<i64: 256, 256>}, {pipeline_mode = #tpu.pipeline_mode<synchronous>, transform_indices = @transform_1, window_bounds = array<i64: 256, 128>}, {pipeline_mode = #tpu.pipeline_mode<synchronous>, transform_indices = @transform_2, window_bounds = array<i64: 1, 128>}, {pipeline_mode = #tpu.pipeline_mode<synchronous>, transform_indices = @transform_3, window_bounds = array<i64: 128, 256>}, {pipeline_mode = #tpu.pipeline_mode<synchronous>, transform_indices = @transform_4, window_bounds = array<i64: 1, 256>}, {pipeline_mode = #tpu.pipeline_mode<synchronous>, transform_indices = @transform_5, window_bounds = array<i64: 128, 128>}, {pipeline_mode = #tpu.pipeline_mode<synchronous>, transform_indices = @transform_6, window_bounds = array<i64: 1, 128>}, {transform_indices = @transform_7, window_bounds = array<i64: 256, 128>}, {transform_indices = @transform_8, window_bounds = array<i64: 256, 128>}, {transform_indices = @transform_9, window_bounds = array<i64: 256, 256>}]} {
    %c0 = arith.constant 0 : index
    %c0_0 = arith.constant 0 : index
    %0 = vector.load %arg1[%c0, %c0_0] : memref<256x256xbf16, #tpu.memory_space<vmem>>, vector<256x256xbf16>
    %c0_1 = arith.constant 0 : index
    %c0_2 = arith.constant 0 : index
    %1 = vector.load %arg2[%c0_1, %c0_2] : memref<256x128xbf16, #tpu.memory_space<vmem>>, vector<256x128xbf16>
    %cst = arith.constant dense<0.000000e+00> : vector<256x128xf32>
    %2 = tpu.matmul %0, %1, %cst {dimension_numbers = #tpu.dot_dimension_numbers<[1], [0], [0], [1], [0, 0, 1, 1], [], []>} : vector<256x256xbf16>, vector<256x128xbf16>, vector<256x128xf32> -> vector<256x128xf32>
    %c0_3 = arith.constant 0 : index
    %c0_4 = arith.constant 0 : index
    %3 = vector.load %arg3[%c0_3, %c0_4] : memref<1x128xf32, #tpu.memory_space<vmem>>, vector<1x128xf32>
    %4 = vector.broadcast %3 : vector<1x128xf32> to vector<256x128xf32>
    %5 = arith.addf %2, %4 : vector<256x128xf32>
    %cst_5 = arith.constant 0.000000e+00 : f32
    %6 = vector.broadcast %cst_5 : f32 to vector<256x128xf32>
    %7 = arith.maximumf %5, %6 : vector<256x128xf32>
    %c0_6 = arith.constant 0 : index
    %c0_7 = arith.constant 0 : index
    %8 = vector.load %arg9[%c0_6, %c0_7] : memref<256x128xf32, #tpu.memory_space<vmem>>, vector<256x128xf32>
    tpu.vector_store %arg9[%c0_6, %c0_7], %7 {strides = array<i32>} : memref<256x128xf32, #tpu.memory_space<vmem>>, vector<256x128xf32>,
    %9 = arith.truncf %7 : vector<256x128xf32> to vector<256x128xbf16>
    %c0_8 = arith.constant 0 : index
    %c0_9 = arith.constant 0 : index
    %10 = vector.load %arg4[%c0_8, %c0_9] : memref<128x256xbf16, #tpu.memory_space<vmem>>, vector<128x256xbf16>
    %cst_10 = arith.constant dense<0.000000e+00> : vector<256x256xf32>
    %11 = tpu.matmul %9, %10, %cst_10 {dimension_numbers = #tpu.dot_dimension_numbers<[1], [0], [0], [1], [0, 0, 1, 1], [], []>} : vector<256x128xbf16>, vector<128x256xbf16>, vector<256x256xf32> -> vector<256x256xf32>
    %c0_11 = arith.constant 0 : index
    %c0_12 = arith.constant 0 : index
    %12 = vector.load %arg5[%c0_11, %c0_12] : memref<1x256xf32, #tpu.memory_space<vmem>>, vector<1x256xf32>
    %13 = vector.broadcast %12 : vector<1x256xf32> to vector<256x256xf32>
    %14 = arith.addf %11, %13 : vector<256x256xf32>
    %cst_13 = arith.constant 0.000000e+00 : f32
    %15 = vector.broadcast %cst_13 : f32 to vector<256x256xf32>
    %16 = arith.maximumf %14, %15 : vector<256x256xf32>
    %c0_14 = arith.constant 0 : index
    %c0_15 = arith.constant 0 : index
    %17 = vector.load %arg10[%c0_14, %c0_15] : memref<256x256xf32, #tpu.memory_space<vmem>>, vector<256x256xf32>
    tpu.vector_store %arg10[%c0_14, %c0_15], %16 {strides = array<i32>} : memref<256x256xf32, #tpu.memory_space<vmem>>, vector<256x256xf32>,
    %c0_16 = arith.constant 0 : index
    %c0_17 = arith.constant 0 : index
    %18 = vector.load %arg6[%c0_16, %c0_17] : memref<128x128xbf16, #tpu.memory_space<vmem>>, vector<128x128xbf16>
    %cst_18 = arith.constant dense<0.000000e+00> : vector<256x128xf32>
    %19 = tpu.matmul %9, %18, %cst_18 {dimension_numbers = #tpu.dot_dimension_numbers<[1], [0], [0], [1], [0, 0, 1, 1], [], []>} : vector<256x128xbf16>, vector<128x128xbf16>, vector<256x128xf32> -> vector<256x128xf32>
    %c0_19 = arith.constant 0 : index
    %c0_20 = arith.constant 0 : index
    %20 = vector.load %arg7[%c0_19, %c0_20] : memref<1x128xf32, #tpu.memory_space<vmem>>, vector<1x128xf32>
    %21 = vector.broadcast %20 : vector<1x128xf32> to vector<256x128xf32>
    %22 = arith.addf %19, %21 : vector<256x128xf32>
    %c0_21 = arith.constant 0 : index
    %c0_22 = arith.constant 0 : index
    %23 = vector.load %arg8[%c0_21, %c0_22] : memref<256x128xf32, #tpu.memory_space<vmem>>, vector<256x128xf32>
    tpu.vector_store %arg8[%c0_21, %c0_22], %22 {strides = array<i32>} : memref<256x128xf32, #tpu.memory_space<vmem>>, vector<256x128xf32>,
    return
  }
  func.func @transform_0(%arg0: i32) -> (i32, i32) {
    %c0_i32 = arith.constant 0 : i32
    %c0_i32_0 = arith.constant 0 : i32
    return %arg0, %c0_i32 : i32, i32
  }
  func.func @transform_1(%arg0: i32) -> (i32, i32) {
    %c0_i32 = arith.constant 0 : i32
    %c0_i32_0 = arith.constant 0 : i32
    %c0_i32_1 = arith.constant 0 : i32
    return %c0_i32, %c0_i32_0 : i32, i32
  }
  func.func @transform_2(%arg0: i32) -> (i32, i32) {
    %c0_i32 = arith.constant 0 : i32
    %c0_i32_0 = arith.constant 0 : i32
    %c0_i32_1 = arith.constant 0 : i32
    return %c0_i32, %c0_i32_0 : i32, i32
  }
  func.func @transform_3(%arg0: i32) -> (i32, i32) {
    %c0_i32 = arith.constant 0 : i32
    %c0_i32_0 = arith.constant 0 : i32
    %c0_i32_1 = arith.constant 0 : i32
    return %c0_i32, %c0_i32_0 : i32, i32
  }
  func.func @transform_4(%arg0: i32) -> (i32, i32) {
    %c0_i32 = arith.constant 0 : i32
    %c0_i32_0 = arith.constant 0 : i32
    %c0_i32_1 = arith.constant 0 : i32
    return %c0_i32, %c0_i32_0 : i32, i32
  }
  func.func @transform_5(%arg0: i32) -> (i32, i32) {
    %c0_i32 = arith.constant 0 : i32
    %c0_i32_0 = arith.constant 0 : i32
    %c0_i32_1 = arith.constant 0 : i32
    return %c0_i32, %c0_i32_0 : i32, i32
  }
  func.func @transform_6(%arg0: i32) -> (i32, i32) {
    %c0_i32 = arith.constant 0 : i32
    %c0_i32_0 = arith.constant 0 : i32
    %c0_i32_1 = arith.constant 0 : i32
    return %c0_i32, %c0_i32_0 : i32, i32
  }
  func.func @transform_7(%arg0: i32) -> (i32, i32) {
    %c0_i32 = arith.constant 0 : i32
    %c0_i32_0 = arith.constant 0 : i32
    return %arg0, %c0_i32 : i32, i32
  }
  func.func @transform_8(%arg0: i32) -> (i32, i32) {
    %c0_i32 = arith.constant 0 : i32
    %c0_i32_0 = arith.constant 0 : i32
    return %arg0, %c0_i32 : i32, i32
  }
  func.func @transform_9(%arg0: i32) -> (i32, i32) {
    %c0_i32 = arith.constant 0 : i32
    %c0_i32_0 = arith.constant 0 : i32
    return %arg0, %c0_i32 : i32, i32
  }
}

</mosaic_0001>

<llo_original>
// kernel: tpu_custom_call.1
$region0: #{tpu_custom_call.1}
  #allocation0 [shape = 'u32[]', space=smem, size = 0x4, offset = 0x4, fixed_abs, tag = 'smem constant byte address 0x4 - core index']
  #allocation1 [shape = 'u32[144,128]{1,0:T(1,128)}', space=vmem, size = 0x12000, scoped, tag = 'internal scratch']
  %s0 = inlined_call_operand.hbm [shape: bf16[256,256], index: 0, kind: input, shape index: {}]
  %s1 = inlined_call_operand.hbm [shape: bf16[256,128], index: 1, kind: input, shape index: {}]
  %s2 = inlined_call_operand.vmem [shape: f32[1,128], index: 2, kind: input, shape index: {}]
  %s3 = inlined_call_operand.hbm [shape: bf16[128,256], index: 3, kind: input, shape index: {}]
  %s4 = inlined_call_operand.vmem [shape: f32[1,256], index: 4, kind: input, shape index: {}]
  %s5 = inlined_call_operand.hbm [shape: bf16[128,128], index: 5, kind: input, shape index: {}]
  %s6 = inlined_call_operand.vmem [shape: f32[1,128], index: 6, kind: input, shape index: {}]
  %s7 = inlined_call_operand.hbm [shape: f32[256,128], index: 7, kind: output, shape index: {0}]
  %s8 = inlined_call_operand.hbm [shape: f32[256,128], index: 8, kind: output, shape index: {1}]
  %s9 = inlined_call_operand.hbm [shape: f32[256,256], index: 9, kind: output, shape index: {2}]
  %10 = xla_tuple %s7, %s8, %s9
  %s11 = sld [smem:[#allocation0]]
  $region70: #{tpu_custom_call.1} parent=0
    _
  %s13 = ssub.s32 1, %s11
  %s14 = scalar_select 0, %s13, %s11
  $region1: #{tpu_custom_call.1} parent=0
    #allocation2 [shape = 'u8[131072]{0}', space=vmem, size = 0x20000, scoped, tag = 'input window, operand 0, single buffered']
    #allocation3 [shape = 's32[1]{0}', space=sflag, size = 0x4, scoped, tag = 'scoped memory for tpu_custom_call.1']
    #allocation4 [shape = 's32[1]{0}', space=sflag, size = 0x4, scoped, tag = 'scoped memory for tpu_custom_call.1']
    #allocation5 [shape = 'u8[65536]{0}', space=vmem, size = 0x10000, scoped, tag = 'input window, operand 1, single buffered']
    #allocation6 [shape = 's32[1]{0}', space=sflag, size = 0x4, scoped, tag = 'scoped memory for tpu_custom_call.1']
    #allocation7 [shape = 'u8[65536]{0}', space=vmem, size = 0x10000, scoped, tag = 'input window, operand 3, single buffered']
    #allocation8 [shape = 'u8[32768]{0}', space=vmem, size = 0x8000, scoped, tag = 'input window, operand 5, single buffered']
    #allocation9 [shape = 's32[1]{0}', space=sflag, size = 0x4, scoped, tag = 'scoped memory for tpu_custom_call.1']
    #allocation10 [shape = 'u8[131072]{0}', space=vmem, size = 0x20000, scoped, tag = 'output window, operand 0, single buffered']
    #allocation11 [shape = 'u8[131072]{0}', space=vmem, size = 0x20000, scoped, tag = 'output window, operand 1, single buffered']
    #allocation12 [shape = 's32[1]{0}', space=sflag, size = 0x4, scoped, tag = 'scoped memory for tpu_custom_call.1']
    #allocation13 [shape = 'u8[262144]{0}', space=vmem, size = 0x40000, scoped, tag = 'output window, operand 2, single buffered']
    %15 = vsyncpa [#allocation3], 0
    %16 = vsyncpa [#allocation6], 0
    %17 = vsyncpa [#allocation9], 0
    %18 = vsyncpa [#allocation4], 0
    %19 = vsyncpa [#allocation12], 0
    // Predicated region
    $region2: #{tpu_custom_call.1} parent=1 // pred_check
      _
    $region3: #{tpu_custom_call.1} parent=1 // pred_check_branch
      %21 = sbr.rel (0) target = $region5
    $region4: #{tpu_custom_call.1} parent=1 // pred_region
      %s23 = ssub.s32 4096, 4096
      %24 = vsyncadd [#allocation3], %s23
      %s25 = sshll.u32 [#allocation2], 4
      %s26 = int_to_ptr.vmem [resolvable:$true] %s25
      %31 = dma.hbm_to_vmem [thread:$0]  %s0, 4096, %s26, [#allocation3], 128, 128, 8
    $region5: #{tpu_custom_call.1} parent=1 // pred_fallthru
      _
    // Predicated region
    $region6: #{tpu_custom_call.1} parent=1 // pred_check
      _
    $region7: #{tpu_custom_call.1} parent=1 // pred_check_branch
      %33 = sbr.rel (0) target = $region9
    $region8: #{tpu_custom_call.1} parent=1 // pred_region
      %s35 = ssub.s32 2048, 2048
      %36 = vsyncadd [#allocation6], %s35
      %s37 = sshll.u32 [#allocation5], 4
      %s38 = int_to_ptr.vmem [resolvable:$true] %s37
      %43 = dma.hbm_to_vmem [thread:$0]  %s1, 2048, %s38, [#allocation6], 64, 64, 4
    $region9: #{tpu_custom_call.1} parent=1 // pred_fallthru
      _
    // Predicated region
    $region10: #{tpu_custom_call.1} parent=1 // pred_check
      _
    $region11: #{tpu_custom_call.1} parent=1 // pred_check_branch
      %45 = sbr.rel (0) target = $region13
    $region12: #{tpu_custom_call.1} parent=1 // pred_region
      _
    $region13: #{tpu_custom_call.1} parent=1 // pred_fallthru
      _
    // Predicated region
    $region14: #{tpu_custom_call.1} parent=1 // pred_check
      _
    $region15: #{tpu_custom_call.1} parent=1 // pred_check_branch
      %47 = sbr.rel (0) target = $region17
    $region16: #{tpu_custom_call.1} parent=1 // pred_region
      %s49 = ssub.s32 2048, 2048
      %50 = vsyncadd [#allocation6], %s49
      %s51 = sshll.u32 [#allocation7], 4
      %s52 = int_to_ptr.vmem [resolvable:$true] %s51
      %57 = dma.hbm_to_vmem [thread:$0]  %s3, 2048, %s52, [#allocation6], 128, 128, 8
    $region17: #{tpu_custom_call.1} parent=1 // pred_fallthru
      _
    // Predicated region
    $region18: #{tpu_custom_call.1} parent=1 // pred_check
      _
    $region19: #{tpu_custom_call.1} parent=1 // pred_check_branch
      %59 = sbr.rel (0) target = $region21
    $region20: #{tpu_custom_call.1} parent=1 // pred_region
      _
    $region21: #{tpu_custom_call.1} parent=1 // pred_fallthru
      _
    // Predicated region
    $region22: #{tpu_custom_call.1} parent=1 // pred_check
      _
    $region23: #{tpu_custom_call.1} parent=1 // pred_check_branch
      %61 = sbr.rel (0) target = $region25
    $region24: #{tpu_custom_call.1} parent=1 // pred_region
      %s63 = ssub.s32 1024, 1024
      %64 = vsyncadd [#allocation9], %s63
      %s65 = sshll.u32 [#allocation8], 4
      %s66 = int_to_ptr.vmem [resolvable:$true] %s65
      %71 = dma.hbm_to_vmem [thread:$0]  %s5, 1024, %s66, [#allocation9], 64, 64, 4
    $region25: #{tpu_custom_call.1} parent=1 // pred_fallthru
      _
    // Predicated region
    $region26: #{tpu_custom_call.1} parent=1 // pred_check
      _
    $region27: #{tpu_custom_call.1} parent=1 // pred_check_branch
      %73 = sbr.rel (0) target = $region29
    $region28: #{tpu_custom_call.1} parent=1 // pred_region
      _
    $region29: #{tpu_custom_call.1} parent=1 // pred_fallthru
      _
    // Predicated region
    $region30: #{tpu_custom_call.1} parent=1 // pred_check
      _
    $region31: #{tpu_custom_call.1} parent=1 // pred_check_branch
      %75 = sbr.rel (0) target = $region33
    $region32: #{tpu_custom_call.1} parent=1 // pred_region
      %76 = dma.done [#allocation3], 4096
    $region33: #{tpu_custom_call.1} parent=1 // pred_fallthru
      _
    // Predicated region
    $region34: #{tpu_custom_call.1} parent=1 // pred_check
      _
    $region35: #{tpu_custom_call.1} parent=1 // pred_check_branch
      %78 = sbr.rel (0) target = $region37
    $region36: #{tpu_custom_call.1} parent=1 // pred_region
      %79 = dma.done [#allocation6], 2048
    $region37: #{tpu_custom_call.1} parent=1 // pred_fallthru
      _
    // Predicated region
    $region38: #{tpu_custom_call.1} parent=1 // pred_check
      _
    $region39: #{tpu_custom_call.1} parent=1 // pred_check_branch
      %81 = sbr.rel (0) target = $region41
    $region40: #{tpu_custom_call.1} parent=1 // pred_region
      %82 = dma.done [#allocation6], 2048
    $region41: #{tpu_custom_call.1} parent=1 // pred_fallthru
      _
    // Predicated region
    $region42: #{tpu_custom_call.1} parent=1 // pred_check
      _
    $region43: #{tpu_custom_call.1} parent=1 // pred_check_branch
      %84 = sbr.rel (0) target = $region45
    $region44: #{tpu_custom_call.1} parent=1 // pred_region
      %85 = dma.done [#allocation9], 1024
    $region45: #{tpu_custom_call.1} parent=1 // pred_fallthru
      _
    %v87 = vld [vmem:[#allocation2] sm:$0xff]
    %v88 = vld [vmem:[#allocation2 + $0x8] sm:$0xff]
    %v89 = vld [vmem:[#allocation2 + $0x10] sm:$0xff]
    %v90 = vld [vmem:[#allocation2 + $0x18] sm:$0xff]
    %v91 = vld [vmem:[#allocation2 + $0x20] sm:$0xff]
    %v92 = vld [vmem:[#allocation2 + $0x28] sm:$0xff]
    %v93 = vld [vmem:[#allocation2 + $0x30] sm:$0xff]
    %v94 = vld [vmem:[#allocation2 + $0x38] sm:$0xff]
    %v95 = vld [vmem:[#allocation2 + $0x40] sm:$0xff]
    %v96 = vld [vmem:[#allocation2 + $0x48] sm:$0xff]
    %v97 = vld [vmem:[#allocation2 + $0x50] sm:$0xff]
    %v98 = vld [vmem:[#allocation2 + $0x58] sm:$0xff]
    %v99 = vld [vmem:[#allocation2 + $0x60] sm:$0xff]
    %v100 = vld [vmem:[#allocation2 + $0x68] sm:$0xff]
    %v101 = vld [vmem:[#allocation2 + $0x70] sm:$0xff]
    %v102 = vld [vmem:[#allocation2 + $0x78] sm:$0xff]
    %v103 = vld [vmem:[#allocation2 + $0x80] sm:$0xff]
    %v104 = vld [vmem:[#allocation2 + $0x88] sm:$0xff]
    %v105 = vld [vmem:[#allocation2 + $0x90] sm:$0xff]
    %v106 = vld [vmem:[#allocation2 + $0x98] sm:$0xff]
    %v107 = vld [vmem:[#allocation2 + $0xa0] sm:$0xff]
    %v108 = vld [vmem:[#allocation2 + $0xa8] sm:$0xff]
    %v109 = vld [vmem:[#allocation2 + $0xb0] sm:$0xff]
    %v110 = vld [vmem:[#allocation2 + $0xb8] sm:$0xff]
    %v111 = vld [vmem:[#allocation2 + $0xc0] sm:$0xff]
    %v112 = vld [vmem:[#allocation2 + $0xc8] sm:$0xff]
    %v113 = vld [vmem:[#allocation2 + $0xd0] sm:$0xff]
    %v114 = vld [vmem:[#allocation2 + $0xd8] sm:$0xff]
    %v115 = vld [vmem:[#allocation2 + $0xe0] sm:$0xff]
    %v116 = vld [vmem:[#allocation2 + $0xe8] sm:$0xff]
    %v117 = vld [vmem:[#allocation2 + $0xf0] sm:$0xff]
    %v118 = vld [vmem:[#allocation2 + $0xf8] sm:$0xff]
    %v119 = vld [vmem:[#allocation5] sm:$0xf]
    %v120 = vld [vmem:[#allocation5 + $0x4] sm:$0xf]
    %v121 = vld [vmem:[#allocation5 + $0x8] sm:$0xf]
    %v122 = vld [vmem:[#allocation5 + $0xc] sm:$0xf]
    %v123 = vld [vmem:[#allocation5 + $0x10] sm:$0xf]
    %v124 = vld [vmem:[#allocation5 + $0x14] sm:$0xf]
    %v125 = vld [vmem:[#allocation5 + $0x18] sm:$0xf]
    %v126 = vld [vmem:[#allocation5 + $0x1c] sm:$0xf]
    %v127 = vld [vmem:[#allocation5 + $0x20] sm:$0xf]
    %v128 = vld [vmem:[#allocation5 + $0x24] sm:$0xf]
    %v129 = vld [vmem:[#allocation5 + $0x28] sm:$0xf]
    %v130 = vld [vmem:[#allocation5 + $0x2c] sm:$0xf]
    %v131 = vld [vmem:[#allocation5 + $0x30] sm:$0xf]
    %v132 = vld [vmem:[#allocation5 + $0x34] sm:$0xf]
    %v133 = vld [vmem:[#allocation5 + $0x38] sm:$0xf]
    %v134 = vld [vmem:[#allocation5 + $0x3c] sm:$0xf]
    %v135 = vld [vmem:[#allocation5 + $0x40] sm:$0xf]
    %v136 = vld [vmem:[#allocation5 + $0x44] sm:$0xf]
    %v137 = vld [vmem:[#allocation5 + $0x48] sm:$0xf]
    %v138 = vld [vmem:[#allocation5 + $0x4c] sm:$0xf]
    %v139 = vld [vmem:[#allocation5 + $0x50] sm:$0xf]
    %v140 = vld [vmem:[#allocation5 + $0x54] sm:$0xf]
    %v141 = vld [vmem:[#allocation5 + $0x58] sm:$0xf]
    %v142 = vld [vmem:[#allocation5 + $0x5c] sm:$0xf]
    %v143 = vld [vmem:[#allocation5 + $0x60] sm:$0xf]
    %v144 = vld [vmem:[#allocation5 + $0x64] sm:$0xf]
    %v145 = vld [vmem:[#allocation5 + $0x68] sm:$0xf]
    %v146 = vld [vmem:[#allocation5 + $0x6c] sm:$0xf]
    %v147 = vld [vmem:[#allocation5 + $0x70] sm:$0xf]
    %v148 = vld [vmem:[#allocation5 + $0x74] sm:$0xf]
    %v149 = vld [vmem:[#allocation5 + $0x78] sm:$0xf]
    %v150 = vld [vmem:[#allocation5 + $0x7c] sm:$0xf]
    %v151 = vld [vmem:[%s2] sm:$0x1]
    %v153 = vlaneseq
    %v154 = vshrl.u32 %v153, 7
    %v155 = vsub.s32 0, %v154
    %v156 = vrot.slane %v151, %v155
    %v190 = vunpack.c.l.b16 %v87
    %v191 = vunpack.c.h.b16 %v87
    %v192 = vunpack.c.l.b16 %v88
    %v193 = vunpack.c.h.b16 %v88
    %v194 = vunpack.c.l.b16 %v89
    %v195 = vunpack.c.h.b16 %v89
    %v196 = vunpack.c.l.b16 %v90
    %v197 = vunpack.c.h.b16 %v90
    %v198 = vunpack.c.l.b16 %v91
    %v199 = vunpack.c.h.b16 %v91
    %v200 = vunpack.c.l.b16 %v92
    %v201 = vunpack.c.h.b16 %v92
    %v202 = vunpack.c.l.b16 %v93
    %v203 = vunpack.c.h.b16 %v93
    %v204 = vunpack.c.l.b16 %v94
    %v205 = vunpack.c.h.b16 %v94
    %v206 = vunpack.c.l.b16 %v95
    %v207 = vunpack.c.h.b16 %v95
    %v208 = vunpack.c.l.b16 %v96
    %v209 = vunpack.c.h.b16 %v96
    %v210 = vunpack.c.l.b16 %v97
    %v211 = vunpack.c.h.b16 %v97
    %v212 = vunpack.c.l.b16 %v98
    %v213 = vunpack.c.h.b16 %v98
    %v214 = vunpack.c.l.b16 %v99
    %v215 = vunpack.c.h.b16 %v99
    %v216 = vunpack.c.l.b16 %v100
    %v217 = vunpack.c.h.b16 %v100
    %v218 = vunpack.c.l.b16 %v101
    %v219 = vunpack.c.h.b16 %v101
    %v220 = vunpack.c.l.b16 %v102
    %v221 = vunpack.c.h.b16 %v102
    %v222 = vunpack.c.l.b16 %v103
    %v223 = vunpack.c.h.b16 %v103
    %v224 = vunpack.c.l.b16 %v104
    %v225 = vunpack.c.h.b16 %v104
    %v226 = vunpack.c.l.b16 %v105
    %v227 = vunpack.c.h.b16 %v105
    %v228 = vunpack.c.l.b16 %v106
    %v229 = vunpack.c.h.b16 %v106
    %v230 = vunpack.c.l.b16 %v107
    %v231 = vunpack.c.h.b16 %v107
    %v232 = vunpack.c.l.b16 %v108
    %v233 = vunpack.c.h.b16 %v108
    %v234 = vunpack.c.l.b16 %v109
    %v235 = vunpack.c.h.b16 %v109
    %v236 = vunpack.c.l.b16 %v110
    %v237 = vunpack.c.h.b16 %v110
    %v238 = vunpack.c.l.b16 %v111
    %v239 = vunpack.c.h.b16 %v111
    %v240 = vunpack.c.l.b16 %v112
    %v241 = vunpack.c.h.b16 %v112
    %v242 = vunpack.c.l.b16 %v113
    %v243 = vunpack.c.h.b16 %v113
    %v244 = vunpack.c.l.b16 %v114
    %v245 = vunpack.c.h.b16 %v114
    %v246 = vunpack.c.l.b16 %v115
    %v247 = vunpack.c.h.b16 %v115
    %v248 = vunpack.c.l.b16 %v116
    %v249 = vunpack.c.h.b16 %v116
    %v250 = vunpack.c.l.b16 %v117
    %v251 = vunpack.c.h.b16 %v117
    %v252 = vunpack.c.l.b16 %v118
    %v253 = vunpack.c.h.b16 %v118
    %v254 = vpack.c.b16 %v192, %v190
    %v255 = vpack.c.b16 %v193, %v191
    %v256 = vpack.c.b16 %v196, %v194
    %v257 = vpack.c.b16 %v197, %v195
    %v258 = vpack.c.b16 %v200, %v198
    %v259 = vpack.c.b16 %v201, %v199
    %v260 = vpack.c.b16 %v204, %v202
    %v261 = vpack.c.b16 %v205, %v203
    %v262 = vpack.c.b16 %v208, %v206
    %v263 = vpack.c.b16 %v209, %v207
    %v264 = vpack.c.b16 %v212, %v210
    %v265 = vpack.c.b16 %v213, %v211
    %v266 = vpack.c.b16 %v216, %v214
    %v267 = vpack.c.b16 %v217, %v215
    %v268 = vpack.c.b16 %v220, %v218
    %v269 = vpack.c.b16 %v221, %v219
    %v270 = vpack.c.b16 %v224, %v222
    %v271 = vpack.c.b16 %v225, %v223
    %v272 = vpack.c.b16 %v228, %v226
    %v273 = vpack.c.b16 %v229, %v227
    %v274 = vpack.c.b16 %v232, %v230
    %v275 = vpack.c.b16 %v233, %v231
    %v276 = vpack.c.b16 %v236, %v234
    %v277 = vpack.c.b16 %v237, %v235
    %v278 = vpack.c.b16 %v240, %v238
    %v279 = vpack.c.b16 %v241, %v239
    %v280 = vpack.c.b16 %v244, %v242
    %v281 = vpack.c.b16 %v245, %v243
    %v282 = vpack.c.b16 %v248, %v246
    %v283 = vpack.c.b16 %v249, %v247
    %v284 = vpack.c.b16 %v252, %v250
    %v285 = vpack.c.b16 %v253, %v251
    %v350 = vunpack.c.l.b16 %v119
    %v351 = vunpack.c.l.b16 %v120
    %v352 = vunpack.c.l.b16 %v121
    %v353 = vunpack.c.l.b16 %v122
    %v354 = vunpack.c.l.b16 %v123
    %v355 = vunpack.c.l.b16 %v124
    %v356 = vunpack.c.l.b16 %v125
    %v357 = vunpack.c.l.b16 %v126
    %v358 = vunpack.c.l.b16 %v127
    %v359 = vunpack.c.l.b16 %v128
    %v360 = vunpack.c.l.b16 %v129
    %v361 = vunpack.c.l.b16 %v130
    %v362 = vunpack.c.l.b16 %v131
    %v363 = vunpack.c.l.b16 %v132
    %v364 = vunpack.c.l.b16 %v133
    %v365 = vunpack.c.l.b16 %v134
    %v366 = vunpack.c.l.b16 %v135
    %v367 = vunpack.c.l.b16 %v136
    %v368 = vunpack.c.l.b16 %v137
    %v369 = vunpack.c.l.b16 %v138
    %v370 = vunpack.c.l.b16 %v139
    %v371 = vunpack.c.l.b16 %v140
    %v372 = vunpack.c.l.b16 %v141
    %v373 = vunpack.c.l.b16 %v142
    %v374 = vunpack.c.l.b16 %v143
    %v375 = vunpack.c.l.b16 %v144
    %v376 = vunpack.c.l.b16 %v145
    %v377 = vunpack.c.l.b16 %v146
    %v378 = vunpack.c.l.b16 %v147
    %v379 = vunpack.c.l.b16 %v148
    %v380 = vunpack.c.l.b16 %v149
    %v381 = vunpack.c.l.b16 %v150
    %v382 = vpack.c.b16 %v351, %v350
    %v383 = vpack.c.b16 %v353, %v352
    %v384 = vpack.c.b16 %v355, %v354
    %v385 = vpack.c.b16 %v357, %v356
    %v386 = vpack.c.b16 %v359, %v358
    %v387 = vpack.c.b16 %v361, %v360
    %v388 = vpack.c.b16 %v363, %v362
    %v389 = vpack.c.b16 %v365, %v364
    %v390 = vpack.c.b16 %v367, %v366
    %v391 = vpack.c.b16 %v369, %v368
    %v392 = vpack.c.b16 %v371, %v370
    %v393 = vpack.c.b16 %v373, %v372
    %v394 = vpack.c.b16 %v375, %v374
    %v395 = vpack.c.b16 %v377, %v376
    %v396 = vpack.c.b16 %v379, %v378
    %v397 = vpack.c.b16 %v381, %v380
    %414 = vmatprep.subr.bf16.mxu0 0
    %415 = vmatpush1.bf16.msra.mxu0 %v389
    %416 = vmatprep.subr.bf16.mxu0 0
    %417 = vmatpush1.bf16.msra.mxu0 %v388
    %418 = vmatprep.subr.bf16.mxu0 0
    %419 = vmatpush1.bf16.msra.mxu0 %v387
    %420 = vmatprep.subr.bf16.mxu0 0
    %421 = vmatpush1.bf16.msra.mxu0 %v386
    %422 = vmatprep.subr.bf16.mxu0 0
    %423 = vmatpush1.bf16.msra.mxu0 %v385
    %424 = vmatprep.subr.bf16.mxu0 0
    %425 = vmatpush1.bf16.msra.mxu0 %v384
    %426 = vmatprep.subr.bf16.mxu0 0
    %427 = vmatpush1.bf16.msra.mxu0 %v383
    %428 = vmatprep.subr.bf16.mxu0 0
    %429 = vmatpush1.bf16.msra.mxu0 %v382
    %430 = vmatprep.subr.bf16.mxu0 0
    %431 = vmatpush2.bf16.msra.mxu0 %v397
    %432 = vmatprep.subr.bf16.mxu0 0
    %433 = vmatpush2.bf16.msra.mxu0 %v396
    %434 = vmatprep.subr.bf16.mxu0 0
    %435 = vmatpush2.bf16.msra.mxu0 %v395
    %436 = vmatprep.subr.bf16.mxu0 0
    %437 = vmatpush2.bf16.msra.mxu0 %v394
    %438 = vmatprep.subr.bf16.mxu0 0
    %439 = vmatpush2.bf16.msra.mxu0 %v393
    %440 = vmatprep.subr.bf16.mxu0 0
    %441 = vmatpush2.bf16.msra.mxu0 %v392
    %442 = vmatprep.subr.bf16.mxu0 0
    %443 = vmatpush2.bf16.msra.mxu0 %v391
    %444 = vmatprep.subr.bf16.mxu0 0
    %445 = vmatpush2.bf16.msra.mxu0 %v390
    %446 = vmatprep.mubr.bf16.mxu0 %v255
    %447 = vmatmul.mubr.bf16.gmra.mxu0 %v254
    %v448 = vpop.f32.mrf.mxu0
    %v449 = vadd.f32 %v156, %v448
    %v450 = vpop.f32.mrf.mxu0
    %v451 = vpop.f32.mrf.mxu0
    %v452 = vadd.f32 %v156, %v451
    %v453 = vpop.f32.mrf.mxu0
    %454 = vmatprep.mubr.bf16.mxu0 %v257
    %455 = vmatmul.mubr.bf16.gmra.mxu0 %v256
    %v456 = vpop.f32.mrf.mxu0
    %v457 = vadd.f32 %v156, %v456
    %v458 = vpop.f32.mrf.mxu0
    %v459 = vpop.f32.mrf.mxu0
    %v460 = vadd.f32 %v156, %v459
    %v461 = vpop.f32.mrf.mxu0
    %462 = vmatprep.mubr.bf16.mxu0 %v259
    %463 = vmatmul.mubr.bf16.gmra.mxu0 %v258
    %v464 = vpop.f32.mrf.mxu0
    %v465 = vadd.f32 %v156, %v464
    %v466 = vpop.f32.mrf.mxu0
    %v467 = vpop.f32.mrf.mxu0
    %v468 = vadd.f32 %v156, %v467
    %v469 = vpop.f32.mrf.mxu0
    %470 = vmatprep.mubr.bf16.mxu0 %v261
    %471 = vmatmul.mubr.bf16.gmra.mxu0 %v260
    %v472 = vpop.f32.mrf.mxu0
    %v473 = vadd.f32 %v156, %v472
    %v474 = vpop.f32.mrf.mxu0
    %v475 = vpop.f32.mrf.mxu0
    %v476 = vadd.f32 %v156, %v475
    %v477 = vpop.f32.mrf.mxu0
    %478 = vmatprep.mubr.bf16.mxu0 %v263
    %479 = vmatmul.mubr.bf16.gmra.mxu0 %v262
    %v480 = vpop.f32.mrf.mxu0
    %v481 = vadd.f32 %v156, %v480
    %v482 = vpop.f32.mrf.mxu0
    %v483 = vpop.f32.mrf.mxu0
    %v484 = vadd.f32 %v156, %v483
    %v485 = vpop.f32.mrf.mxu0
    %486 = vmatprep.mubr.bf16.mxu0 %v265
    %487 = vmatmul.mubr.bf16.gmra.mxu0 %v264
    %v488 = vpop.f32.mrf.mxu0
    %v489 = vadd.f32 %v156, %v488
    %v490 = vpop.f32.mrf.mxu0
    %v491 = vpop.f32.mrf.mxu0
    %v492 = vadd.f32 %v156, %v491
    %v493 = vpop.f32.mrf.mxu0
    %494 = vmatprep.mubr.bf16.mxu0 %v267
    %495 = vmatmul.mubr.bf16.gmra.mxu0 %v266
    %v496 = vpop.f32.mrf.mxu0
    %v497 = vadd.f32 %v156, %v496
    %v498 = vpop.f32.mrf.mxu0
    %v499 = vpop.f32.mrf.mxu0
    %v500 = vadd.f32 %v156, %v499
    %v501 = vpop.f32.mrf.mxu0
    %502 = vmatprep.mubr.bf16.mxu0 %v269
    %503 = vmatmul.mubr.bf16.gmra.mxu0 %v268
    %v504 = vpop.f32.mrf.mxu0
    %v505 = vadd.f32 %v156, %v504
    %v506 = vpop.f32.mrf.mxu0
    %v507 = vpop.f32.mrf.mxu0
    %v508 = vadd.f32 %v156, %v507
    %v509 = vpop.f32.mrf.mxu0
    %510 = vmatprep.mubr.bf16.mxu0 %v271
    %511 = vmatmul.mubr.bf16.gmra.mxu0 %v270
    %v512 = vpop.f32.mrf.mxu0
    %v513 = vadd.f32 %v156, %v512
    %v514 = vpop.f32.mrf.mxu0
    %v515 = vpop.f32.mrf.mxu0
    %v516 = vadd.f32 %v156, %v515
    %v517 = vpop.f32.mrf.mxu0
    %518 = vmatprep.mubr.bf16.mxu0 %v273
    %519 = vmatmul.mubr.bf16.gmra.mxu0 %v272
    %v520 = vpop.f32.mrf.mxu0
    %v521 = vadd.f32 %v156, %v520
    %v522 = vpop.f32.mrf.mxu0
    %v523 = vpop.f32.mrf.mxu0
    %v524 = vadd.f32 %v156, %v523
    %v525 = vpop.f32.mrf.mxu0
    %526 = vmatprep.mubr.bf16.mxu0 %v275
    %527 = vmatmul.mubr.bf16.gmra.mxu0 %v274
    %v528 = vpop.f32.mrf.mxu0
    %v529 = vadd.f32 %v156, %v528
    %v530 = vpop.f32.mrf.mxu0
    %v531 = vpop.f32.mrf.mxu0
    %v532 = vadd.f32 %v156, %v531
    %v533 = vpop.f32.mrf.mxu0
    %534 = vmatprep.mubr.bf16.mxu0 %v277
    %535 = vmatmul.mubr.bf16.gmra.mxu0 %v276
    %v536 = vpop.f32.mrf.mxu0
    %v537 = vadd.f32 %v156, %v536
    %v538 = vpop.f32.mrf.mxu0
    %v539 = vpop.f32.mrf.mxu0
    %v540 = vadd.f32 %v156, %v539
    %v541 = vpop.f32.mrf.mxu0
    %542 = vmatprep.mubr.bf16.mxu0 %v279
    %543 = vmatmul.mubr.bf16.gmra.mxu0 %v278
    %v544 = vpop.f32.mrf.mxu0
    %v545 = vadd.f32 %v156, %v544
    %v546 = vpop.f32.mrf.mxu0
    %v547 = vpop.f32.mrf.mxu0
    %v548 = vadd.f32 %v156, %v547
    %v549 = vpop.f32.mrf.mxu0
    %550 = vmatprep.mubr.bf16.mxu0 %v281
    %551 = vmatmul.mubr.bf16.gmra.mxu0 %v280
    %v552 = vpop.f32.mrf.mxu0
    %v553 = vadd.f32 %v156, %v552
    %v554 = vpop.f32.mrf.mxu0
    %v555 = vpop.f32.mrf.mxu0
    %v556 = vadd.f32 %v156, %v555
    %v557 = vpop.f32.mrf.mxu0
    %558 = vmatprep.mubr.bf16.mxu0 %v283
    %559 = vmatmul.mubr.bf16.gmra.mxu0 %v282
    %v560 = vpop.f32.mrf.mxu0
    %v561 = vadd.f32 %v156, %v560
    %v562 = vpop.f32.mrf.mxu0
    %v563 = vpop.f32.mrf.mxu0
    %v564 = vadd.f32 %v156, %v563
    %v565 = vpop.f32.mrf.mxu0
    %566 = vmatprep.mubr.bf16.mxu0 %v285
    %567 = vmatmul.mubr.bf16.gmra.mxu0 %v284
    %v568 = vpop.f32.mrf.mxu0
    %v569 = vadd.f32 %v156, %v568
    %v570 = vpop.f32.mrf.mxu0
    %v571 = vpop.f32.mrf.mxu0
    %v572 = vadd.f32 %v156, %v571
    %v573 = vpop.f32.mrf.mxu0
    %574 = vdwg.mxu0
    %v575 = vmax.f32 %v449, 0.0
    %v576 = vmax.f32 %v452, 0.0
    %v577 = vmax.f32 %v457, 0.0
    %v578 = vmax.f32 %v460, 0.0
    %v579 = vmax.f32 %v465, 0.0
    %v580 = vmax.f32 %v468, 0.0
    %v581 = vmax.f32 %v473, 0.0
    %v582 = vmax.f32 %v476, 0.0
    %v583 = vmax.f32 %v481, 0.0
    %v584 = vmax.f32 %v484, 0.0
    %v585 = vmax.f32 %v489, 0.0
    %v586 = vmax.f32 %v492, 0.0
    %v587 = vmax.f32 %v497, 0.0
    %v588 = vmax.f32 %v500, 0.0
    %v589 = vmax.f32 %v505, 0.0
    %v590 = vmax.f32 %v508, 0.0
    %v591 = vmax.f32 %v513, 0.0
    %v592 = vmax.f32 %v516, 0.0
    %v593 = vmax.f32 %v521, 0.0
    %v594 = vmax.f32 %v524, 0.0
    %v595 = vmax.f32 %v529, 0.0
    %v596 = vmax.f32 %v532, 0.0
    %v597 = vmax.f32 %v537, 0.0
    %v598 = vmax.f32 %v540, 0.0
    %v599 = vmax.f32 %v545, 0.0
    %v600 = vmax.f32 %v548, 0.0
    %v601 = vmax.f32 %v553, 0.0
    %v602 = vmax.f32 %v556, 0.0
    %v603 = vmax.f32 %v561, 0.0
    %v604 = vmax.f32 %v564, 0.0
    %v605 = vmax.f32 %v569, 0.0
    %v606 = vmax.f32 %v572, 0.0
    %607 = vst [vmem:[#allocation11] sm:$0xff] %v575
    %608 = vst [vmem:[#allocation11 + $0x8] sm:$0xff] %v576
    %609 = vst [vmem:[#allocation11 + $0x10] sm:$0xff] %v577
    %610 = vst [vmem:[#allocation11 + $0x18] sm:$0xff] %v578
    %611 = vst [vmem:[#allocation11 + $0x20] sm:$0xff] %v579
    %612 = vst [vmem:[#allocation11 + $0x28] sm:$0xff] %v580
    %613 = vst [vmem:[#allocation11 + $0x30] sm:$0xff] %v581
    %614 = vst [vmem:[#allocation11 + $0x38] sm:$0xff] %v582
    %615 = vst [vmem:[#allocation11 + $0x40] sm:$0xff] %v583
    %616 = vst [vmem:[#allocation11 + $0x48] sm:$0xff] %v584
    %617 = vst [vmem:[#allocation11 + $0x50] sm:$0xff] %v585
    %618 = vst [vmem:[#allocation11 + $0x58] sm:$0xff] %v586
    %619 = vst [vmem:[#allocation11 + $0x60] sm:$0xff] %v587
    %620 = vst [vmem:[#allocation11 + $0x68] sm:$0xff] %v588
    %621 = vst [vmem:[#allocation11 + $0x70] sm:$0xff] %v589
    %622 = vst [vmem:[#allocation11 + $0x78] sm:$0xff] %v590
    %623 = vst [vmem:[#allocation11 + $0x80] sm:$0xff] %v591
    %624 = vst [vmem:[#allocation11 + $0x88] sm:$0xff] %v592
    %625 = vst [vmem:[#allocation11 + $0x90] sm:$0xff] %v593
    %626 = vst [vmem:[#allocation11 + $0x98] sm:$0xff] %v594
    %627 = vst [vmem:[#allocation11 + $0xa0] sm:$0xff] %v595
    %628 = vst [vmem:[#allocation11 + $0xa8] sm:$0xff] %v596
    %629 = vst [vmem:[#allocation11 + $0xb0] sm:$0xff] %v597
    %630 = vst [vmem:[#allocation11 + $0xb8] sm:$0xff] %v598
    %631 = vst [vmem:[#allocation11 + $0xc0] sm:$0xff] %v599
    %632 = vst [vmem:[#allocation11 + $0xc8] sm:$0xff] %v600
    %633 = vst [vmem:[#allocation11 + $0xd0] sm:$0xff] %v601
    %634 = vst [vmem:[#allocation11 + $0xd8] sm:$0xff] %v602
    %635 = vst [vmem:[#allocation11 + $0xe0] sm:$0xff] %v603
    %636 = vst [vmem:[#allocation11 + $0xe8] sm:$0xff] %v604
    %637 = vst [vmem:[#allocation11 + $0xf0] sm:$0xff] %v605
    %638 = vst [vmem:[#allocation11 + $0xf8] sm:$0xff] %v606
    %v639 = vpack.c.bf16 %v576, %v575
    %v640 = vpack.c.bf16 %v578, %v577
    %v641 = vpack.c.bf16 %v580, %v579
    %v642 = vpack.c.bf16 %v582, %v581
    %v643 = vpack.c.bf16 %v584, %v583
    %v644 = vpack.c.bf16 %v586, %v585
    %v645 = vpack.c.bf16 %v588, %v587
    %v646 = vpack.c.bf16 %v590, %v589
    %v647 = vpack.c.bf16 %v592, %v591
    %v648 = vpack.c.bf16 %v594, %v593
    %v649 = vpack.c.bf16 %v596, %v595
    %v650 = vpack.c.bf16 %v598, %v597
    %v651 = vpack.c.bf16 %v600, %v599
    %v652 = vpack.c.bf16 %v602, %v601
    %v653 = vpack.c.bf16 %v604, %v603
    %v654 = vpack.c.bf16 %v606, %v605
    %v655 = vld [vmem:[#allocation7] sm:$0xff]
    %v656 = vld [vmem:[#allocation7 + $0x8] sm:$0xff]
    %v657 = vld [vmem:[#allocation7 + $0x10] sm:$0xff]
    %v658 = vld [vmem:[#allocation7 + $0x18] sm:$0xff]
    %v659 = vld [vmem:[#allocation7 + $0x20] sm:$0xff]
    %v660 = vld [vmem:[#allocation7 + $0x28] sm:$0xff]
    %v661 = vld [vmem:[#allocation7 + $0x30] sm:$0xff]
    %v662 = vld [vmem:[#allocation7 + $0x38] sm:$0xff]
    %v663 = vld [vmem:[#allocation7 + $0x40] sm:$0xff]
    %v664 = vld [vmem:[#allocation7 + $0x48] sm:$0xff]
    %v665 = vld [vmem:[#allocation7 + $0x50] sm:$0xff]
    %v666 = vld [vmem:[#allocation7 + $0x58] sm:$0xff]
    %v667 = vld [vmem:[#allocation7 + $0x60] sm:$0xff]
    %v668 = vld [vmem:[#allocation7 + $0x68] sm:$0xff]
    %v669 = vld [vmem:[#allocation7 + $0x70] sm:$0xff]
    %v670 = vld [vmem:[#allocation7 + $0x78] sm:$0xff]
    %v671 = vld [vmem:[%s4] sm:$0x3]
    %v673 = vlaneseq
    %v674 = vshrl.u32 %v673, 7
    %v675 = vsub.s32 0, %v674
    %v676 = vrot.slane %v671, %v675
    %v677 = vlaneseq
    %v678 = vshrl.u32 %v677, 7
    %v679 = vsub.s32 1, %v678
    %v680 = vrot.slane %v671, %v679
    %v699 = vunpack.c.l.b16 %v655
    %v700 = vunpack.c.h.b16 %v655
    %v701 = vunpack.c.l.b16 %v656
    %v702 = vunpack.c.h.b16 %v656
    %v703 = vunpack.c.l.b16 %v657
    %v704 = vunpack.c.h.b16 %v657
    %v705 = vunpack.c.l.b16 %v658
    %v706 = vunpack.c.h.b16 %v658
    %v707 = vunpack.c.l.b16 %v659
    %v708 = vunpack.c.h.b16 %v659
    %v709 = vunpack.c.l.b16 %v660
    %v710 = vunpack.c.h.b16 %v660
    %v711 = vunpack.c.l.b16 %v661
    %v712 = vunpack.c.h.b16 %v661
    %v713 = vunpack.c.l.b16 %v662
    %v714 = vunpack.c.h.b16 %v662
    %v715 = vunpack.c.l.b16 %v663
    %v716 = vunpack.c.h.b16 %v663
    %v717 = vunpack.c.l.b16 %v664
    %v718 = vunpack.c.h.b16 %v664
    %v719 = vunpack.c.l.b16 %v665
    %v720 = vunpack.c.h.b16 %v665
    %v721 = vunpack.c.l.b16 %v666
    %v722 = vunpack.c.h.b16 %v666
    %v723 = vunpack.c.l.b16 %v667
    %v724 = vunpack.c.h.b16 %v667
    %v725 = vunpack.c.l.b16 %v668
    %v726 = vunpack.c.h.b16 %v668
    %v727 = vunpack.c.l.b16 %v669
    %v728 = vunpack.c.h.b16 %v669
    %v729 = vunpack.c.l.b16 %v670
    %v730 = vunpack.c.h.b16 %v670
    %v731 = vpack.c.b16 %v701, %v699
    %v732 = vpack.c.b16 %v702, %v700
    %v733 = vpack.c.b16 %v705, %v703
    %v734 = vpack.c.b16 %v706, %v704
    %v735 = vpack.c.b16 %v709, %v707
    %v736 = vpack.c.b16 %v710, %v708
    %v737 = vpack.c.b16 %v713, %v711
    %v738 = vpack.c.b16 %v714, %v712
    %v739 = vpack.c.b16 %v717, %v715
    %v740 = vpack.c.b16 %v718, %v716
    %v741 = vpack.c.b16 %v721, %v719
    %v742 = vpack.c.b16 %v722, %v720
    %v743 = vpack.c.b16 %v725, %v723
    %v744 = vpack.c.b16 %v726, %v724
    %v745 = vpack.c.b16 %v729, %v727
    %v746 = vpack.c.b16 %v730, %v728
    %763 = vmatprep.subr.bf16.mxu0 %v746
    %764 = vmatpush1.bf16.msra.mxu0 %v745
    %765 = vmatprep.subr.bf16.mxu0 %v744
    %766 = vmatpush1.bf16.msra.mxu0 %v743
    %767 = vmatprep.subr.bf16.mxu0 %v742
    %768 = vmatpush1.bf16.msra.mxu0 %v741
    %769 = vmatprep.subr.bf16.mxu0 %v740
    %770 = vmatpush1.bf16.msra.mxu0 %v739
    %771 = vmatprep.subr.bf16.mxu0 %v738
    %772 = vmatpush1.bf16.msra.mxu0 %v737
    %773 = vmatprep.subr.bf16.mxu0 %v736
    %774 = vmatpush1.bf16.msra.mxu0 %v735
    %775 = vmatprep.subr.bf16.mxu0 %v734
    %776 = vmatpush1.bf16.msra.mxu0 %v733
    %777 = vmatprep.subr.bf16.mxu0 %v732
    %778 = vmatpush1.bf16.msra.mxu0 %v731
    %779 = vmatprep.subr.bf16.mxu0 0
    %780 = vmatpush2.bf16.msra.mxu0 0
    %781 = vmatprep.subr.bf16.mxu0 0
    %782 = vmatpush2.bf16.msra.mxu0 0
    %783 = vmatprep.subr.bf16.mxu0 0
    %784 = vmatpush2.bf16.msra.mxu0 0
    %785 = vmatprep.subr.bf16.mxu0 0
    %786 = vmatpush2.bf16.msra.mxu0 0
    %787 = vmatprep.subr.bf16.mxu0 0
    %788 = vmatpush2.bf16.msra.mxu0 0
    %789 = vmatprep.subr.bf16.mxu0 0
    %790 = vmatpush2.bf16.msra.mxu0 0
    %791 = vmatprep.subr.bf16.mxu0 0
    %792 = vmatpush2.bf16.msra.mxu0 0
    %793 = vmatprep.subr.bf16.mxu0 0
    %794 = vmatpush2.bf16.msra.mxu0 0
    %795 = vmatprep.mubr.bf16.mxu0 0
    %796 = vmatmul.mubr.bf16.gmra.mxu0 %v639
    %v797 = vpop.f32.mrf.mxu0
    %v798 = vadd.f32 %v676, %v797
    %v799 = vpop.f32.mrf.mxu0
    %v800 = vadd.f32 %v680, %v799
    %v801 = vpop.f32.mrf.mxu0
    %v802 = vadd.f32 %v676, %v801
    %v803 = vpop.f32.mrf.mxu0
    %v804 = vadd.f32 %v680, %v803
    %805 = vmatprep.mubr.bf16.mxu0 0
    %806 = vmatmul.mubr.bf16.gmra.mxu0 %v640
    %v807 = vpop.f32.mrf.mxu0
    %v808 = vadd.f32 %v676, %v807
    %v809 = vpop.f32.mrf.mxu0
    %v810 = vadd.f32 %v680, %v809
    %v811 = vpop.f32.mrf.mxu0
    %v812 = vadd.f32 %v676, %v811
    %v813 = vpop.f32.mrf.mxu0
    %v814 = vadd.f32 %v680, %v813
    %815 = vmatprep.mubr.bf16.mxu0 0
    %816 = vmatmul.mubr.bf16.gmra.mxu0 %v641
    %v817 = vpop.f32.mrf.mxu0
    %v818 = vadd.f32 %v676, %v817
    %v819 = vpop.f32.mrf.mxu0
    %v820 = vadd.f32 %v680, %v819
    %v821 = vpop.f32.mrf.mxu0
    %v822 = vadd.f32 %v676, %v821
    %v823 = vpop.f32.mrf.mxu0
    %v824 = vadd.f32 %v680, %v823
    %825 = vmatprep.mubr.bf16.mxu0 0
    %826 = vmatmul.mubr.bf16.gmra.mxu0 %v642
    %v827 = vpop.f32.mrf.mxu0
    %v828 = vadd.f32 %v676, %v827
    %v829 = vpop.f32.mrf.mxu0
    %v830 = vadd.f32 %v680, %v829
    %v831 = vpop.f32.mrf.mxu0
    %v832 = vadd.f32 %v676, %v831
    %v833 = vpop.f32.mrf.mxu0
    %v834 = vadd.f32 %v680, %v833
    %835 = vmatprep.mubr.bf16.mxu0 0
    %836 = vmatmul.mubr.bf16.gmra.mxu0 %v643
    %v837 = vpop.f32.mrf.mxu0
    %v838 = vadd.f32 %v676, %v837
    %v839 = vpop.f32.mrf.mxu0
    %v840 = vadd.f32 %v680, %v839
    %v841 = vpop.f32.mrf.mxu0
    %v842 = vadd.f32 %v676, %v841
    %v843 = vpop.f32.mrf.mxu0
    %v844 = vadd.f32 %v680, %v843
    %845 = vmatprep.mubr.bf16.mxu0 0
    %846 = vmatmul.mubr.bf16.gmra.mxu0 %v644
    %v847 = vpop.f32.mrf.mxu0
    %v848 = vadd.f32 %v676, %v847
    %v849 = vpop.f32.mrf.mxu0
    %v850 = vadd.f32 %v680, %v849
    %v851 = vpop.f32.mrf.mxu0
    %v852 = vadd.f32 %v676, %v851
    %v853 = vpop.f32.mrf.mxu0
    %v854 = vadd.f32 %v680, %v853
    %855 = vmatprep.mubr.bf16.mxu0 0
    %856 = vmatmul.mubr.bf16.gmra.mxu0 %v645
    %v857 = vpop.f32.mrf.mxu0
    %v858 = vadd.f32 %v676, %v857
    %v859 = vpop.f32.mrf.mxu0
    %v860 = vadd.f32 %v680, %v859
    %v861 = vpop.f32.mrf.mxu0
    %v862 = vadd.f32 %v676, %v861
    %v863 = vpop.f32.mrf.mxu0
    %v864 = vadd.f32 %v680, %v863
    %865 = vmatprep.mubr.bf16.mxu0 0
    %866 = vmatmul.mubr.bf16.gmra.mxu0 %v646
    %v867 = vpop.f32.mrf.mxu0
    %v868 = vadd.f32 %v676, %v867
    %v869 = vpop.f32.mrf.mxu0
    %v870 = vadd.f32 %v680, %v869
    %v871 = vpop.f32.mrf.mxu0
    %v872 = vadd.f32 %v676, %v871
    %v873 = vpop.f32.mrf.mxu0
    %v874 = vadd.f32 %v680, %v873
    %875 = vmatprep.mubr.bf16.mxu0 0
    %876 = vmatmul.mubr.bf16.gmra.mxu0 %v647
    %v877 = vpop.f32.mrf.mxu0
    %v878 = vadd.f32 %v676, %v877
    %v879 = vpop.f32.mrf.mxu0
    %v880 = vadd.f32 %v680, %v879
    %v881 = vpop.f32.mrf.mxu0
    %v882 = vadd.f32 %v676, %v881
    %v883 = vpop.f32.mrf.mxu0
    %v884 = vadd.f32 %v680, %v883
    %885 = vmatprep.mubr.bf16.mxu0 0
    %886 = vmatmul.mubr.bf16.gmra.mxu0 %v648
    %v887 = vpop.f32.mrf.mxu0
    %v888 = vadd.f32 %v676, %v887
    %v889 = vpop.f32.mrf.mxu0
    %v890 = vadd.f32 %v680, %v889
    %v891 = vpop.f32.mrf.mxu0
    %v892 = vadd.f32 %v676, %v891
    %v893 = vpop.f32.mrf.mxu0
    %v894 = vadd.f32 %v680, %v893
    %895 = vmatprep.mubr.bf16.mxu0 0
    %896 = vmatmul.mubr.bf16.gmra.mxu0 %v649
    %v897 = vpop.f32.mrf.mxu0
    %v898 = vadd.f32 %v676, %v897
    %v899 = vpop.f32.mrf.mxu0
    %v900 = vadd.f32 %v680, %v899
    %v901 = vpop.f32.mrf.mxu0
    %v902 = vadd.f32 %v676, %v901
    %v903 = vpop.f32.mrf.mxu0
    %v904 = vadd.f32 %v680, %v903
    %905 = vmatprep.mubr.bf16.mxu0 0
    %906 = vmatmul.mubr.bf16.gmra.mxu0 %v650
    %v907 = vpop.f32.mrf.mxu0
    %v908 = vadd.f32 %v676, %v907
    %v909 = vpop.f32.mrf.mxu0
    %v910 = vadd.f32 %v680, %v909
    %v911 = vpop.f32.mrf.mxu0
    %v912 = vadd.f32 %v676, %v911
    %v913 = vpop.f32.mrf.mxu0
    %v914 = vadd.f32 %v680, %v913
    %915 = vmatprep.mubr.bf16.mxu0 0
    %916 = vmatmul.mubr.bf16.gmra.mxu0 %v651
    %v917 = vpop.f32.mrf.mxu0
    %v918 = vadd.f32 %v676, %v917
    %v919 = vpop.f32.mrf.mxu0
    %v920 = vadd.f32 %v680, %v919
    %v921 = vpop.f32.mrf.mxu0
    %v922 = vadd.f32 %v676, %v921
    %v923 = vpop.f32.mrf.mxu0
    %v924 = vadd.f32 %v680, %v923
    %925 = vmatprep.mubr.bf16.mxu0 0
    %926 = vmatmul.mubr.bf16.gmra.mxu0 %v652
    %v927 = vpop.f32.mrf.mxu0
    %v928 = vadd.f32 %v676, %v927
    %v929 = vpop.f32.mrf.mxu0
    %v930 = vadd.f32 %v680, %v929
    %v931 = vpop.f32.mrf.mxu0
    %v932 = vadd.f32 %v676, %v931
    %v933 = vpop.f32.mrf.mxu0
    %v934 = vadd.f32 %v680, %v933
    %935 = vmatprep.mubr.bf16.mxu0 0
    %936 = vmatmul.mubr.bf16.gmra.mxu0 %v653
    %v937 = vpop.f32.mrf.mxu0
    %v938 = vadd.f32 %v676, %v937
    %v939 = vpop.f32.mrf.mxu0
    %v940 = vadd.f32 %v680, %v939
    %v941 = vpop.f32.mrf.mxu0
    %v942 = vadd.f32 %v676, %v941
    %v943 = vpop.f32.mrf.mxu0
    %v944 = vadd.f32 %v680, %v943
    %945 = vmatprep.mubr.bf16.mxu0 0
    %946 = vmatmul.mubr.bf16.gmra.mxu0 %v654
    %v947 = vpop.f32.mrf.mxu0
    %v948 = vadd.f32 %v676, %v947
    %v949 = vpop.f32.mrf.mxu0
    %v950 = vadd.f32 %v680, %v949
    %v951 = vpop.f32.mrf.mxu0
    %v952 = vadd.f32 %v676, %v951
    %v953 = vpop.f32.mrf.mxu0
    %v954 = vadd.f32 %v680, %v953
    %955 = vdwg.mxu0
    %v956 = vmax.f32 %v798, 0.0
    %v957 = vmax.f32 %v800, 0.0
    %v958 = vmax.f32 %v802, 0.0
    %v959 = vmax.f32 %v804, 0.0
    %v960 = vmax.f32 %v808, 0.0
    %v961 = vmax.f32 %v810, 0.0
    %v962 = vmax.f32 %v812, 0.0
    %v963 = vmax.f32 %v814, 0.0
    %v964 = vmax.f32 %v818, 0.0
    %v965 = vmax.f32 %v820, 0.0
    %v966 = vmax.f32 %v822, 0.0
    %v967 = vmax.f32 %v824, 0.0
    %v968 = vmax.f32 %v828, 0.0
    %v969 = vmax.f32 %v830, 0.0
    %v970 = vmax.f32 %v832, 0.0
    %v971 = vmax.f32 %v834, 0.0
    %v972 = vmax.f32 %v838, 0.0
    %v973 = vmax.f32 %v840, 0.0
    %v974 = vmax.f32 %v842, 0.0
    %v975 = vmax.f32 %v844, 0.0
    %v976 = vmax.f32 %v848, 0.0
    %v977 = vmax.f32 %v850, 0.0
    %v978 = vmax.f32 %v852, 0.0
    %v979 = vmax.f32 %v854, 0.0
    %v980 = vmax.f32 %v858, 0.0
    %v981 = vmax.f32 %v860, 0.0
    %v982 = vmax.f32 %v862, 0.0
    %v983 = vmax.f32 %v864, 0.0
    %v984 = vmax.f32 %v868, 0.0
    %v985 = vmax.f32 %v870, 0.0
    %v986 = vmax.f32 %v872, 0.0
    %v987 = vmax.f32 %v874, 0.0
    %v988 = vmax.f32 %v878, 0.0
    %v989 = vmax.f32 %v880, 0.0
    %v990 = vmax.f32 %v882, 0.0
    %v991 = vmax.f32 %v884, 0.0
    %v992 = vmax.f32 %v888, 0.0
    %v993 = vmax.f32 %v890, 0.0
    %v994 = vmax.f32 %v892, 0.0
    %v995 = vmax.f32 %v894, 0.0
    %v996 = vmax.f32 %v898, 0.0
    %v997 = vmax.f32 %v900, 0.0
    %v998 = vmax.f32 %v902, 0.0
    %v999 = vmax.f32 %v904, 0.0
    %v1000 = vmax.f32 %v908, 0.0
    %v1001 = vmax.f32 %v910, 0.0
    %v1002 = vmax.f32 %v912, 0.0
    %v1003 = vmax.f32 %v914, 0.0
    %v1004 = vmax.f32 %v918, 0.0
    %v1005 = vmax.f32 %v920, 0.0
    %v1006 = vmax.f32 %v922, 0.0
    %v1007 = vmax.f32 %v924, 0.0
    %v1008 = vmax.f32 %v928, 0.0
    %v1009 = vmax.f32 %v930, 0.0
    %v1010 = vmax.f32 %v932, 0.0
    %v1011 = vmax.f32 %v934, 0.0
    %v1012 = vmax.f32 %v938, 0.0
    %v1013 = vmax.f32 %v940, 0.0
    %v1014 = vmax.f32 %v942, 0.0
    %v1015 = vmax.f32 %v944, 0.0
    %v1016 = vmax.f32 %v948, 0.0
    %v1017 = vmax.f32 %v950, 0.0
    %v1018 = vmax.f32 %v952, 0.0
    %v1019 = vmax.f32 %v954, 0.0
    %1020 = vst [vmem:[#allocation13] sm:$0xff] %v956
    %1021 = vst [vmem:[#allocation13 + $0x8] sm:$0xff] %v957
    %1022 = vst [vmem:[#allocation13 + $0x10] sm:$0xff] %v958
    %1023 = vst [vmem:[#allocation13 + $0x18] sm:$0xff] %v959
    %1024 = vst [vmem:[#allocation13 + $0x20] sm:$0xff] %v960
    %1025 = vst [vmem:[#allocation13 + $0x28] sm:$0xff] %v961
    %1026 = vst [vmem:[#allocation13 + $0x30] sm:$0xff] %v962
    %1027 = vst [vmem:[#allocation13 + $0x38] sm:$0xff] %v963
    %1028 = vst [vmem:[#allocation13 + $0x40] sm:$0xff] %v964
    %1029 = vst [vmem:[#allocation13 + $0x48] sm:$0xff] %v965
    %1030 = vst [vmem:[#allocation13 + $0x50] sm:$0xff] %v966
    %1031 = vst [vmem:[#allocation13 + $0x58] sm:$0xff] %v967
    %1032 = vst [vmem:[#allocation13 + $0x60] sm:$0xff] %v968
    %1033 = vst [vmem:[#allocation13 + $0x68] sm:$0xff] %v969
    %1034 = vst [vmem:[#allocation13 + $0x70] sm:$0xff] %v970
    %1035 = vst [vmem:[#allocation13 + $0x78] sm:$0xff] %v971
    %1036 = vst [vmem:[#allocation13 + $0x80] sm:$0xff] %v972
    %1037 = vst [vmem:[#allocation13 + $0x88] sm:$0xff] %v973
    %1038 = vst [vmem:[#allocation13 + $0x90] sm:$0xff] %v974
    %1039 = vst [vmem:[#allocation13 + $0x98] sm:$0xff] %v975
    %1040 = vst [vmem:[#allocation13 + $0xa0] sm:$0xff] %v976
    %1041 = vst [vmem:[#allocation13 + $0xa8] sm:$0xff] %v977
    %1042 = vst [vmem:[#allocation13 + $0xb0] sm:$0xff] %v978
    %1043 = vst [vmem:[#allocation13 + $0xb8] sm:$0xff] %v979
    %1044 = vst [vmem:[#allocation13 + $0xc0] sm:$0xff] %v980
    %1045 = vst [vmem:[#allocation13 + $0xc8] sm:$0xff] %v981
    %1046 = vst [vmem:[#allocation13 + $0xd0] sm:$0xff] %v982
    %1047 = vst [vmem:[#allocation13 + $0xd8] sm:$0xff] %v983
    %1048 = vst [vmem:[#allocation13 + $0xe0] sm:$0xff] %v984
    %1049 = vst [vmem:[#allocation13 + $0xe8] sm:$0xff] %v985
    %1050 = vst [vmem:[#allocation13 + $0xf0] sm:$0xff] %v986
    %1051 = vst [vmem:[#allocation13 + $0xf8] sm:$0xff] %v987
    %1052 = vst [vmem:[#allocation13 + $0x100] sm:$0xff] %v988
    %1053 = vst [vmem:[#allocation13 + $0x108] sm:$0xff] %v989
    %1054 = vst [vmem:[#allocation13 + $0x110] sm:$0xff] %v990
    %1055 = vst [vmem:[#allocation13 + $0x118] sm:$0xff] %v991
    %1056 = vst [vmem:[#allocation13 + $0x120] sm:$0xff] %v992
    %1057 = vst [vmem:[#allocation13 + $0x128] sm:$0xff] %v993
    %1058 = vst [vmem:[#allocation13 + $0x130] sm:$0xff] %v994
    %1059 = vst [vmem:[#allocation13 + $0x138] sm:$0xff] %v995
    %1060 = vst [vmem:[#allocation13 + $0x140] sm:$0xff] %v996
    %1061 = vst [vmem:[#allocation13 + $0x148] sm:$0xff] %v997
    %1062 = vst [vmem:[#allocation13 + $0x150] sm:$0xff] %v998
    %1063 = vst [vmem:[#allocation13 + $0x158] sm:$0xff] %v999
    %1064 = vst [vmem:[#allocation13 + $0x160] sm:$0xff] %v1000
    %1065 = vst [vmem:[#allocation13 + $0x168] sm:$0xff] %v1001
    %1066 = vst [vmem:[#allocation13 + $0x170] sm:$0xff] %v1002
    %1067 = vst [vmem:[#allocation13 + $0x178] sm:$0xff] %v1003
    %1068 = vst [vmem:[#allocation13 + $0x180] sm:$0xff] %v1004
    %1069 = vst [vmem:[#allocation13 + $0x188] sm:$0xff] %v1005
    %1070 = vst [vmem:[#allocation13 + $0x190] sm:$0xff] %v1006
    %1071 = vst [vmem:[#allocation13 + $0x198] sm:$0xff] %v1007
    %1072 = vst [vmem:[#allocation13 + $0x1a0] sm:$0xff] %v1008
    %1073 = vst [vmem:[#allocation13 + $0x1a8] sm:$0xff] %v1009
    %1074 = vst [vmem:[#allocation13 + $0x1b0] sm:$0xff] %v1010
    %1075 = vst [vmem:[#allocation13 + $0x1b8] sm:$0xff] %v1011
    %1076 = vst [vmem:[#allocation13 + $0x1c0] sm:$0xff] %v1012
    %1077 = vst [vmem:[#allocation13 + $0x1c8] sm:$0xff] %v1013
    %1078 = vst [vmem:[#allocation13 + $0x1d0] sm:$0xff] %v1014
    %1079 = vst [vmem:[#allocation13 + $0x1d8] sm:$0xff] %v1015
    %1080 = vst [vmem:[#allocation13 + $0x1e0] sm:$0xff] %v1016
    %1081 = vst [vmem:[#allocation13 + $0x1e8] sm:$0xff] %v1017
    %1082 = vst [vmem:[#allocation13 + $0x1f0] sm:$0xff] %v1018
    %1083 = vst [vmem:[#allocation13 + $0x1f8] sm:$0xff] %v1019
    %v1084 = vld [vmem:[#allocation8] sm:$0xf]
    %v1085 = vld [vmem:[#allocation8 + $0x4] sm:$0xf]
    %v1086 = vld [vmem:[#allocation8 + $0x8] sm:$0xf]
    %v1087 = vld [vmem:[#allocation8 + $0xc] sm:$0xf]
    %v1088 = vld [vmem:[#allocation8 + $0x10] sm:$0xf]
    %v1089 = vld [vmem:[#allocation8 + $0x14] sm:$0xf]
    %v1090 = vld [vmem:[#allocation8 + $0x18] sm:$0xf]
    %v1091 = vld [vmem:[#allocation8 + $0x1c] sm:$0xf]
    %v1092 = vld [vmem:[#allocation8 + $0x20] sm:$0xf]
    %v1093 = vld [vmem:[#allocation8 + $0x24] sm:$0xf]
    %v1094 = vld [vmem:[#allocation8 + $0x28] sm:$0xf]
    %v1095 = vld [vmem:[#allocation8 + $0x2c] sm:$0xf]
    %v1096 = vld [vmem:[#allocation8 + $0x30] sm:$0xf]
    %v1097 = vld [vmem:[#allocation8 + $0x34] sm:$0xf]
    %v1098 = vld [vmem:[#allocation8 + $0x38] sm:$0xf]
    %v1099 = vld [vmem:[#allocation8 + $0x3c] sm:$0xf]
    %v1100 = vld [vmem:[%s6] sm:$0x1]
    %v1102 = vlaneseq
    %v1103 = vshrl.u32 %v1102, 7
    %v1104 = vsub.s32 0, %v1103
    %v1105 = vrot.slane %v1100, %v1104
    %v1123 = vunpack.c.l.b16 %v1084
    %v1124 = vunpack.c.l.b16 %v1085
    %v1125 = vunpack.c.l.b16 %v1086
    %v1126 = vunpack.c.l.b16 %v1087
    %v1127 = vunpack.c.l.b16 %v1088
    %v1128 = vunpack.c.l.b16 %v1089
    %v1129 = vunpack.c.l.b16 %v1090
    %v1130 = vunpack.c.l.b16 %v1091
    %v1131 = vunpack.c.l.b16 %v1092
    %v1132 = vunpack.c.l.b16 %v1093
    %v1133 = vunpack.c.l.b16 %v1094
    %v1134 = vunpack.c.l.b16 %v1095
    %v1135 = vunpack.c.l.b16 %v1096
    %v1136 = vunpack.c.l.b16 %v1097
    %v1137 = vunpack.c.l.b16 %v1098
    %v1138 = vunpack.c.l.b16 %v1099
    %v1139 = vpack.c.b16 %v1124, %v1123
    %v1140 = vpack.c.b16 %v1126, %v1125
    %v1141 = vpack.c.b16 %v1128, %v1127
    %v1142 = vpack.c.b16 %v1130, %v1129
    %v1143 = vpack.c.b16 %v1132, %v1131
    %v1144 = vpack.c.b16 %v1134, %v1133
    %v1145 = vpack.c.b16 %v1136, %v1135
    %v1146 = vpack.c.b16 %v1138, %v1137
    %1155 = vmatprep.subr.bf16.mxu0 0
    %1156 = vmatpush1.bf16.msra.mxu0 %v1146
    %1157 = vmatprep.subr.bf16.mxu0 0
    %1158 = vmatpush1.bf16.msra.mxu0 %v1145
    %1159 = vmatprep.subr.bf16.mxu0 0
    %1160 = vmatpush1.bf16.msra.mxu0 %v1144
    %1161 = vmatprep.subr.bf16.mxu0 0
    %1162 = vmatpush1.bf16.msra.mxu0 %v1143
    %1163 = vmatprep.subr.bf16.mxu0 0
    %1164 = vmatpush1.bf16.msra.mxu0 %v1142
    %1165 = vmatprep.subr.bf16.mxu0 0
    %1166 = vmatpush1.bf16.msra.mxu0 %v1141
    %1167 = vmatprep.subr.bf16.mxu0 0
    %1168 = vmatpush1.bf16.msra.mxu0 %v1140
    %1169 = vmatprep.subr.bf16.mxu0 0
    %1170 = vmatpush1.bf16.msra.mxu0 %v1139
    %1171 = vmatprep.subr.bf16.mxu0 0
    %1172 = vmatpush2.bf16.msra.mxu0 0
    %1173 = vmatprep.subr.bf16.mxu0 0
    %1174 = vmatpush2.bf16.msra.mxu0 0
    %1175 = vmatprep.subr.bf16.mxu0 0
    %1176 = vmatpush2.bf16.msra.mxu0 0
    %1177 = vmatprep.subr.bf16.mxu0 0
    %1178 = vmatpush2.bf16.msra.mxu0 0
    %1179 = vmatprep.subr.bf16.mxu0 0
    %1180 = vmatpush2.bf16.msra.mxu0 0
    %1181 = vmatprep.subr.bf16.mxu0 0
    %1182 = vmatpush2.bf16.msra.mxu0 0
    %1183 = vmatprep.subr.bf16.mxu0 0
    %1184 = vmatpush2.bf16.msra.mxu0 0
    %1185 = vmatprep.subr.bf16.mxu0 0
    %1186 = vmatpush2.bf16.msra.mxu0 0
    %1187 = vmatprep.mubr.bf16.mxu0 0
    %1188 = vmatmul.mubr.bf16.gmra.mxu0 %v639
    %v1189 = vpop.f32.mrf.mxu0
    %v1190 = vadd.f32 %v1105, %v1189
    %v1191 = vpop.f32.mrf.mxu0
    %v1192 = vpop.f32.mrf.mxu0
    %v1193 = vadd.f32 %v1105, %v1192
    %v1194 = vpop.f32.mrf.mxu0
    %1195 = vmatprep.mubr.bf16.mxu0 0
    %1196 = vmatmul.mubr.bf16.gmra.mxu0 %v640
    %v1197 = vpop.f32.mrf.mxu0
    %v1198 = vadd.f32 %v1105, %v1197
    %v1199 = vpop.f32.mrf.mxu0
    %v1200 = vpop.f32.mrf.mxu0
    %v1201 = vadd.f32 %v1105, %v1200
    %v1202 = vpop.f32.mrf.mxu0
    %1203 = vmatprep.mubr.bf16.mxu0 0
    %1204 = vmatmul.mubr.bf16.gmra.mxu0 %v641
    %v1205 = vpop.f32.mrf.mxu0
    %v1206 = vadd.f32 %v1105, %v1205
    %v1207 = vpop.f32.mrf.mxu0
    %v1208 = vpop.f32.mrf.mxu0
    %v1209 = vadd.f32 %v1105, %v1208
    %v1210 = vpop.f32.mrf.mxu0
    %1211 = vmatprep.mubr.bf16.mxu0 0
    %1212 = vmatmul.mubr.bf16.gmra.mxu0 %v642
    %v1213 = vpop.f32.mrf.mxu0
    %v1214 = vadd.f32 %v1105, %v1213
    %v1215 = vpop.f32.mrf.mxu0
    %v1216 = vpop.f32.mrf.mxu0
    %v1217 = vadd.f32 %v1105, %v1216
    %v1218 = vpop.f32.mrf.mxu0
    %1219 = vmatprep.mubr.bf16.mxu0 0
    %1220 = vmatmul.mubr.bf16.gmra.mxu0 %v643
    %v1221 = vpop.f32.mrf.mxu0
    %v1222 = vadd.f32 %v1105, %v1221
    %v1223 = vpop.f32.mrf.mxu0
    %v1224 = vpop.f32.mrf.mxu0
    %v1225 = vadd.f32 %v1105, %v1224
    %v1226 = vpop.f32.mrf.mxu0
    %1227 = vmatprep.mubr.bf16.mxu0 0
    %1228 = vmatmul.mubr.bf16.gmra.mxu0 %v644
    %v1229 = vpop.f32.mrf.mxu0
    %v1230 = vadd.f32 %v1105, %v1229
    %v1231 = vpop.f32.mrf.mxu0
    %v1232 = vpop.f32.mrf.mxu0
    %v1233 = vadd.f32 %v1105, %v1232
    %v1234 = vpop.f32.mrf.mxu0
    %1235 = vmatprep.mubr.bf16.mxu0 0
    %1236 = vmatmul.mubr.bf16.gmra.mxu0 %v645
    %v1237 = vpop.f32.mrf.mxu0
    %v1238 = vadd.f32 %v1105, %v1237
    %v1239 = vpop.f32.mrf.mxu0
    %v1240 = vpop.f32.mrf.mxu0
    %v1241 = vadd.f32 %v1105, %v1240
    %v1242 = vpop.f32.mrf.mxu0
    %1243 = vmatprep.mubr.bf16.mxu0 0
    %1244 = vmatmul.mubr.bf16.gmra.mxu0 %v646
    %v1245 = vpop.f32.mrf.mxu0
    %v1246 = vadd.f32 %v1105, %v1245
    %v1247 = vpop.f32.mrf.mxu0
    %v1248 = vpop.f32.mrf.mxu0
    %v1249 = vadd.f32 %v1105, %v1248
    %v1250 = vpop.f32.mrf.mxu0
    %1251 = vmatprep.mubr.bf16.mxu0 0
    %1252 = vmatmul.mubr.bf16.gmra.mxu0 %v647
    %v1253 = vpop.f32.mrf.mxu0
    %v1254 = vadd.f32 %v1105, %v1253
    %v1255 = vpop.f32.mrf.mxu0
    %v1256 = vpop.f32.mrf.mxu0
    %v1257 = vadd.f32 %v1105, %v1256
    %v1258 = vpop.f32.mrf.mxu0
    %1259 = vmatprep.mubr.bf16.mxu0 0
    %1260 = vmatmul.mubr.bf16.gmra.mxu0 %v648
    %v1261 = vpop.f32.mrf.mxu0
    %v1262 = vadd.f32 %v1105, %v1261
    %v1263 = vpop.f32.mrf.mxu0
    %v1264 = vpop.f32.mrf.mxu0
    %v1265 = vadd.f32 %v1105, %v1264
    %v1266 = vpop.f32.mrf.mxu0
    %1267 = vmatprep.mubr.bf16.mxu0 0
    %1268 = vmatmul.mubr.bf16.gmra.mxu0 %v649
    %v1269 = vpop.f32.mrf.mxu0
    %v1270 = vadd.f32 %v1105, %v1269
    %v1271 = vpop.f32.mrf.mxu0
    %v1272 = vpop.f32.mrf.mxu0
    %v1273 = vadd.f32 %v1105, %v1272
    %v1274 = vpop.f32.mrf.mxu0
    %1275 = vmatprep.mubr.bf16.mxu0 0
    %1276 = vmatmul.mubr.bf16.gmra.mxu0 %v650
    %v1277 = vpop.f32.mrf.mxu0
    %v1278 = vadd.f32 %v1105, %v1277
    %v1279 = vpop.f32.mrf.mxu0
    %v1280 = vpop.f32.mrf.mxu0
    %v1281 = vadd.f32 %v1105, %v1280
    %v1282 = vpop.f32.mrf.mxu0
    %1283 = vmatprep.mubr.bf16.mxu0 0
    %1284 = vmatmul.mubr.bf16.gmra.mxu0 %v651
    %v1285 = vpop.f32.mrf.mxu0
    %v1286 = vadd.f32 %v1105, %v1285
    %v1287 = vpop.f32.mrf.mxu0
    %v1288 = vpop.f32.mrf.mxu0
    %v1289 = vadd.f32 %v1105, %v1288
    %v1290 = vpop.f32.mrf.mxu0
    %1291 = vmatprep.mubr.bf16.mxu0 0
    %1292 = vmatmul.mubr.bf16.gmra.mxu0 %v652
    %v1293 = vpop.f32.mrf.mxu0
    %v1294 = vadd.f32 %v1105, %v1293
    %v1295 = vpop.f32.mrf.mxu0
    %v1296 = vpop.f32.mrf.mxu0
    %v1297 = vadd.f32 %v1105, %v1296
    %v1298 = vpop.f32.mrf.mxu0
    %1299 = vmatprep.mubr.bf16.mxu0 0
    %1300 = vmatmul.mubr.bf16.gmra.mxu0 %v653
    %v1301 = vpop.f32.mrf.mxu0
    %v1302 = vadd.f32 %v1105, %v1301
    %v1303 = vpop.f32.mrf.mxu0
    %v1304 = vpop.f32.mrf.mxu0
    %v1305 = vadd.f32 %v1105, %v1304
    %v1306 = vpop.f32.mrf.mxu0
    %1307 = vmatprep.mubr.bf16.mxu0 0
    %1308 = vmatmul.mubr.bf16.gmra.mxu0 %v654
    %v1309 = vpop.f32.mrf.mxu0
    %v1310 = vadd.f32 %v1105, %v1309
    %v1311 = vpop.f32.mrf.mxu0
    %v1312 = vpop.f32.mrf.mxu0
    %v1313 = vadd.f32 %v1105, %v1312
    %v1314 = vpop.f32.mrf.mxu0
    %1315 = vdwg.mxu0
    %1316 = vst [vmem:[#allocation10] sm:$0xff] %v1190
    %1317 = vst [vmem:[#allocation10 + $0x8] sm:$0xff] %v1193
    %1318 = vst [vmem:[#allocation10 + $0x10] sm:$0xff] %v1198
    %1319 = vst [vmem:[#allocation10 + $0x18] sm:$0xff] %v1201
    %1320 = vst [vmem:[#allocation10 + $0x20] sm:$0xff] %v1206
    %1321 = vst [vmem:[#allocation10 + $0x28] sm:$0xff] %v1209
    %1322 = vst [vmem:[#allocation10 + $0x30] sm:$0xff] %v1214
    %1323 = vst [vmem:[#allocation10 + $0x38] sm:$0xff] %v1217
    %1324 = vst [vmem:[#allocation10 + $0x40] sm:$0xff] %v1222
    %1325 = vst [vmem:[#allocation10 + $0x48] sm:$0xff] %v1225
    %1326 = vst [vmem:[#allocation10 + $0x50] sm:$0xff] %v1230
    %1327 = vst [vmem:[#allocation10 + $0x58] sm:$0xff] %v1233
    %1328 = vst [vmem:[#allocation10 + $0x60] sm:$0xff] %v1238
    %1329 = vst [vmem:[#allocation10 + $0x68] sm:$0xff] %v1241
    %1330 = vst [vmem:[#allocation10 + $0x70] sm:$0xff] %v1246
    %1331 = vst [vmem:[#allocation10 + $0x78] sm:$0xff] %v1249
    %1332 = vst [vmem:[#allocation10 + $0x80] sm:$0xff] %v1254
    %1333 = vst [vmem:[#allocation10 + $0x88] sm:$0xff] %v1257
    %1334 = vst [vmem:[#allocation10 + $0x90] sm:$0xff] %v1262
    %1335 = vst [vmem:[#allocation10 + $0x98] sm:$0xff] %v1265
    %1336 = vst [vmem:[#allocation10 + $0xa0] sm:$0xff] %v1270
    %1337 = vst [vmem:[#allocation10 + $0xa8] sm:$0xff] %v1273
    %1338 = vst [vmem:[#allocation10 + $0xb0] sm:$0xff] %v1278
    %1339 = vst [vmem:[#allocation10 + $0xb8] sm:$0xff] %v1281
    %1340 = vst [vmem:[#allocation10 + $0xc0] sm:$0xff] %v1286
    %1341 = vst [vmem:[#allocation10 + $0xc8] sm:$0xff] %v1289
    %1342 = vst [vmem:[#allocation10 + $0xd0] sm:$0xff] %v1294
    %1343 = vst [vmem:[#allocation10 + $0xd8] sm:$0xff] %v1297
    %1344 = vst [vmem:[#allocation10 + $0xe0] sm:$0xff] %v1302
    %1345 = vst [vmem:[#allocation10 + $0xe8] sm:$0xff] %v1305
    %1346 = vst [vmem:[#allocation10 + $0xf0] sm:$0xff] %v1310
    %1347 = vst [vmem:[#allocation10 + $0xf8] sm:$0xff] %v1313
    // Predicated region
    $region46: #{tpu_custom_call.1} parent=1 // pred_check
      _
    $region47: #{tpu_custom_call.1} parent=1 // pred_check_branch
      %1349 = sbr.rel (0) target = $region49
    $region48: #{tpu_custom_call.1} parent=1 // pred_region
      %s1351 = ssub.s32 4096, 4096
      %1352 = vsyncadd [#allocation4], %s1351
      %s1353 = sshll.u32 [#allocation10], 4
      %s1354 = int_to_ptr.vmem [resolvable:$true] %s1353
      %1359 = dma.vmem_to_hbm [thread:$0]  %s1354, 4096, %s7, [#allocation4], 128, 128, 8
    $region49: #{tpu_custom_call.1} parent=1 // pred_fallthru
      _
    // Predicated region
    $region50: #{tpu_custom_call.1} parent=1 // pred_check
      _
    $region51: #{tpu_custom_call.1} parent=1 // pred_check_branch
      %1361 = sbr.rel (0) target = $region53
    $region52: #{tpu_custom_call.1} parent=1 // pred_region
      %s1363 = ssub.s32 4096, 4096
      %1364 = vsyncadd [#allocation12], %s1363
      %s1365 = sshll.u32 [#allocation11], 4
      %s1366 = int_to_ptr.vmem [resolvable:$true] %s1365
      %1371 = dma.vmem_to_hbm [thread:$0]  %s1366, 4096, %s8, [#allocation12], 128, 128, 8
    $region53: #{tpu_custom_call.1} parent=1 // pred_fallthru
      _
    // Predicated region
    $region54: #{tpu_custom_call.1} parent=1 // pred_check
      _
    $region55: #{tpu_custom_call.1} parent=1 // pred_check_branch
      %1373 = sbr.rel (0) target = $region57
    $region56: #{tpu_custom_call.1} parent=1 // pred_region
      %s1375 = ssub.s32 8192, 8192
      %1376 = vsyncadd [#allocation12], %s1375
      %s1377 = sshll.u32 [#allocation13], 4
      %s1378 = int_to_ptr.vmem [resolvable:$true] %s1377
      %1383 = dma.vmem_to_hbm [thread:$0]  %s1378, 8192, %s9, [#allocation12], 256, 256, 16
    $region57: #{tpu_custom_call.1} parent=1 // pred_fallthru
      _
    // Predicated region
    $region58: #{tpu_custom_call.1} parent=1 // pred_check
      _
    $region59: #{tpu_custom_call.1} parent=1 // pred_check_branch
      %1385 = sbr.rel (0) target = $region61
    $region60: #{tpu_custom_call.1} parent=1 // pred_region
      %1386 = dma.done [#allocation4], 4096
    $region61: #{tpu_custom_call.1} parent=1 // pred_fallthru
      _
    // Predicated region
    $region62: #{tpu_custom_call.1} parent=1 // pred_check
      _
    $region63: #{tpu_custom_call.1} parent=1 // pred_check_branch
      %1388 = sbr.rel (0) target = $region65
    $region64: #{tpu_custom_call.1} parent=1 // pred_region
      %1389 = dma.done [#allocation12], 4096
    $region65: #{tpu_custom_call.1} parent=1 // pred_fallthru
      _
    // Predicated region
    $region66: #{tpu_custom_call.1} parent=1 // pred_check
      _
    $region67: #{tpu_custom_call.1} parent=1 // pred_check_branch
      %1391 = sbr.rel (0) target = $region69
    $region68: #{tpu_custom_call.1} parent=1 // pred_region
      %1392 = dma.done [#allocation12], 8192
    $region69: #{tpu_custom_call.1} parent=1 // pred_fallthru
      _
    %1393 = vsyncpa [#allocation3], 1
    %1394 = vsyncpa [#allocation6], 1
    %1395 = vsyncpa [#allocation9], 1
    %1396 = vsyncpa [#allocation4], 1
    %1397 = vsyncpa [#allocation12], 1

</llo_original>
